<compile_context>
chip_gen: v7x
topology: tpu7x:2x2x1
jax: 0.10.0
libtpu: 0.0.40
codegen_flags: <defaults>
</compile_context>

<pallas_src>
import functools
import math

import jax
import jax.numpy as jnp
from jax.experimental import pallas as pl
from jax.experimental.pallas import tpu as pltpu


_LANE = 128
_WEIGHT_VMEM_BUDGET = 16 << 20   # resident packed-weight bytes (incl. buffering)


def _round_up(x, m):
    return (x + m - 1) // m * m


def _itemsize(dt):
    return jnp.dtype(dt).itemsize


def _block_spec(shape, index_map, buffers=None):
    """BlockSpec, optionally with an explicit pipeline buffer count.

    buffers=1 disables double buffering for blocks whose index_map is constant
    (weights / bias), halving their VMEM residency. Falls back to the default
    pipelining if this jax version has no BlockSpec.pipeline_mode.
    """
    if buffers is not None:
        try:
            return pl.BlockSpec(shape, index_map,
                                pipeline_mode=pl.Buffered(buffers))
        except (TypeError, AttributeError):
            pass
    return pl.BlockSpec(shape, index_map)


def _lstm_cell_kernel(x_ref, h0_ref, c0_ref, wih_ref, whh_ref, b_ref,
                      h1_ref, c1_ref, *, ht, mxu_dtype):
    """One (hidden-tile, batch-tile) block of the LSTM cell.

    x_ref  : (TB, Ip)    input features (native dtype; cast to MXU dtype here)
    h0_ref : (TB, Hp)    previous hidden state (full hidden dim: contraction)
    c0_ref : (TB, HT)    previous cell state, this hidden tile
    wih_ref: (Ip, 4*HT)  packed input weights, gate order [f|i|o|g]
    whh_ref: (Hp, 4*HT)  packed hidden weights, gate order [f|i|o|g]
    b_ref  : (1, 4*HT)   packed bias (fp32)
    h1_ref : (TB, HT)    next hidden state (activation dtype)
    c1_ref : (TB, HT)    next cell state (always fp32)
    """
    # Two accumulating MXU matmuls with fp32 accumulation (v7x MRB accumulates
    # in place; on v5e/v6e the extra result drain is cheap vs. the HBM
    # roundtrip a wrapper-side [x | h0] concat would cost).
    gates = jnp.dot(x_ref[...].astype(mxu_dtype), wih_ref[...],
                    preferred_element_type=jnp.float32)
    gates = gates + jnp.dot(h0_ref[...].astype(mxu_dtype), whh_ref[...],
                            preferred_element_type=jnp.float32)
    gates = gates + b_ref[...]

    # Gate columns are 128-lane aligned -> slices below are free views.
    # sigmoid(x) = 0.5*tanh(0.5*x) + 0.5 : one EUP op per element.
    sig = 0.5 * jnp.tanh(0.5 * gates[:, : 3 * ht]) + 0.5
    f = sig[:, 0 * ht:1 * ht]
    i = sig[:, 1 * ht:2 * ht]
    o = sig[:, 2 * ht:3 * ht]
    g = jnp.tanh(gates[:, 3 * ht:4 * ht])

    c1 = f * c0_ref[...].astype(jnp.float32) + i * g      # fp32 gate math
    h1 = o * jnp.tanh(c1)

    h1_ref[...] = h1.astype(h1_ref.dtype)
    c1_ref[...] = c1                                       # cell state stays fp32


def _pack_weight(w, rows_p, H, Hp, HT, mxu_dtype):
    """(rows, 4H) -> (rows_p, 4*Hp), columns grouped [f|i|o|g] per HT tile."""
    rows = w.shape[0]
    n_ht = Hp // HT
    w = w.reshape(rows, 4, H)
    w = jnp.pad(w, ((0, rows_p - rows), (0, 0), (0, Hp - H)))
    w = w.reshape(rows_p, 4, n_ht, HT).transpose(0, 2, 1, 3)
    return w.reshape(rows_p, n_ht * 4 * HT).astype(mxu_dtype)


def _pick_hidden_tile(Hp, Ip, mxu_dtype):
    """Largest HT (multiple of 128 dividing Hp) keeping resident weights in budget."""
    n128 = Hp // _LANE
    wsz = _itemsize(mxu_dtype)
    for d in range(1, n128 + 1):
        if n128 % d:
            continue
        ht = Hp // d
        bufs = 1 if d == 1 else 2          # single-buffered only when not tiled
        if bufs * (Ip + Hp) * 4 * ht * wsz <= _WEIGHT_VMEM_BUDGET:
            return ht
    return _LANE


def make_lstm_cell(w_ih, w_hh, bias=None, *, mxu_dtype=jnp.bfloat16,
                   batch_tile=256, hidden_tile=None):
    """Pack the LSTM-cell weights once and return step(x, h0, c0) -> (h1, c1).

    Weight packing (pad + per-hidden-tile gate interleave + cast to the MXU
    dtype) is hoisted out of the per-step path: the packed arrays are captured
    by the returned closure, so recurrent stepping adds no packing traffic.

    mxu_dtype: dtype of the MXU weight operands (activations are cast
      in-kernel). bf16 is the right default on v5e / v6e / v7x -- the MXU is
      bf16 native and weight DMA halves -- while all gate math and the cell
      state stay fp32. Pass jnp.float32 for a bit-faithful path.
    """
    I, four_h = w_ih.shape
    H = w_hh.shape[0]
    assert four_h == 4 * H and w_hh.shape == (H, 4 * H)
    if bias is None:
        bias = jnp.zeros((4 * H,), jnp.float32)

    Ip = _round_up(I, _LANE)
    Hp = _round_up(H, _LANE)
    if hidden_tile is None:
        HT = _pick_hidden_tile(Hp, Ip, mxu_dtype)
    else:
        HT = hidden_tile
        assert HT % _LANE == 0 and Hp % HT == 0
    n_ht = Hp // HT

    wih_p = _pack_weight(w_ih, Ip, H, Hp, HT, mxu_dtype)        # (Ip, 4*Hp)
    whh_p = _pack_weight(w_hh, Hp, H, Hp, HT, mxu_dtype)        # (Hp, 4*Hp)
    b = jnp.pad(bias.reshape(4, H).astype(jnp.float32), ((0, 0), (0, Hp - H)))
    b_p = b.reshape(4, n_ht, HT).transpose(1, 0, 2).reshape(1, n_ht * 4 * HT)

    def step(x, h0, c0):
        B = x.shape[0]
        assert x.shape == (B, I) and h0.shape == (B, H) and c0.shape == (B, H)
        act_dtype = x.dtype

        # Batch tiling: multiples of 16 rows (bf16 sublane packing), and at
        # least two batch tiles when B allows so both v7x TensorCores get work.
        mult = 16 if jnp.dtype(mxu_dtype) == jnp.dtype(jnp.bfloat16) else 8
        TB = _round_up(min(batch_tile, _round_up(B, mult)), mult)
        if B > mult and TB >= _round_up(B, mult):
            TB = _round_up((B + 1) // 2, mult)
        Bp = _round_up(B, TB)
        n_bt = Bp // TB

        # Pad activations only when needed (aligned shapes go straight in,
        # zero wrapper-side copies).
        xp = x if (Bp == B and Ip == I) else jnp.pad(x, ((0, Bp - B), (0, Ip - I)))
        h0p = h0 if (Bp == B and Hp == H) else jnp.pad(h0, ((0, Bp - B), (0, Hp - H)))
        c0p = c0 if (Bp == B and Hp == H) else jnp.pad(c0, ((0, Bp - B), (0, Hp - H)))

        # Constant-index weight/bias blocks: single buffer when the hidden
        # axis is not tiled; otherwise keep double buffering so the per-tile
        # weight DMA overlaps compute.
        w_bufs = 1 if n_ht == 1 else None

        # Explicit scoped-VMEM limit from the actual footprint.
        wsz = _itemsize(mxu_dtype)
        nb = 1 if n_ht == 1 else 2
        footprint = (2 * TB * Ip * _itemsize(xp.dtype)
                     + 2 * TB * Hp * _itemsize(h0p.dtype)
                     + 2 * TB * HT * _itemsize(c0p.dtype)
                     + nb * (Ip + Hp) * 4 * HT * wsz
                     + nb * 8 * 4 * HT * 4
                     + 2 * TB * HT * _itemsize(act_dtype)
                     + 2 * TB * HT * 4
                     + TB * 4 * HT * 4)                 # gates intermediate
        vmem_limit = int(min(max(2 * footprint, 32 << 20), 64 << 20))

        cost = pl.CostEstimate(
            flops=2 * Bp * (Ip + Hp) * 4 * Hp,
            transcendentals=5 * Bp * Hp,
            bytes_accessed=(xp.size * _itemsize(xp.dtype)
                            + h0p.size * _itemsize(h0p.dtype)
                            + c0p.size * _itemsize(c0p.dtype)
                            + wih_p.size * wsz + whh_p.size * wsz + b_p.size * 4
                            + Bp * Hp * (_itemsize(act_dtype) + 4)))

        kernel = functools.partial(_lstm_cell_kernel, ht=HT, mxu_dtype=mxu_dtype)

        h1, c1 = pl.pallas_call(
            kernel,
            out_shape=(jax.ShapeDtypeStruct((Bp, Hp), act_dtype),     # h1
                       jax.ShapeDtypeStruct((Bp, Hp), jnp.float32)),  # c1 (fp32)
            grid_spec=pltpu.PrefetchScalarGridSpec(
                num_scalar_prefetch=0,
                # Hidden tiles outer, batch tiles inner: the packed weights
                # stream from HBM exactly once per step.
                grid=(n_ht, n_bt),
                in_specs=[
                    pl.BlockSpec((TB, Ip), lambda hj, bi: (bi, 0)),     # x
                    pl.BlockSpec((TB, Hp), lambda hj, bi: (bi, 0)),     # h0 (full)
                    pl.BlockSpec((TB, HT), lambda hj, bi: (bi, hj)),    # c0 tile
                    _block_spec((Ip, 4 * HT), lambda hj, bi: (0, hj), w_bufs),
                    _block_spec((Hp, 4 * HT), lambda hj, bi: (0, hj), w_bufs),
                    _block_spec((1, 4 * HT), lambda hj, bi: (0, hj), w_bufs),
                ],
                out_specs=[
                    pl.BlockSpec((TB, HT), lambda hj, bi: (bi, hj)),    # h1
                    pl.BlockSpec((TB, HT), lambda hj, bi: (bi, hj)),    # c1
                ],
            ),
            compiler_params=pltpu.CompilerParams(
                dimension_semantics=("parallel", "parallel"),
                vmem_limit_bytes=vmem_limit,
            ),
            cost_estimate=cost,
        )(xp, h0p, c0p, wih_p, whh_p, b_p)

        if Bp != B or Hp != H:
            h1 = h1[:B, :H]
            c1 = c1[:B, :H]
        return h1, c1

    return step


def lstm_cell(x, h0, c0, w_ih, w_hh, bias=None, **kwargs):
    """One-off convenience wrapper (re-packs weights every call; prefer
    make_lstm_cell for recurrent stepping)."""
    return make_lstm_cell(w_ih, w_hh, bias, **kwargs)(x, h0, c0)


if __name__ == "__main__":
    def reference(x, h0, c0, w_ih, w_hh, bias):
        gates = x @ w_ih + h0 @ w_hh + bias[None, :]
        f, i, o, g = jnp.split(gates, 4, axis=1)
        c1 = jax.nn.sigmoid(f) * c0 + jax.nn.sigmoid(i) * jnp.tanh(g)
        h1 = jax.nn.sigmoid(o) * jnp.tanh(c1)
        return h1, c1

    def make_inputs(key, batch, input_size, hidden_size):
        k_ih, k_hh, k_b, k_x, k_h, k_c = jax.random.split(key, 6)
        stdv = 1.0 / math.sqrt(hidden_size)   # mirrors reset_parameters()
        w_ih = jax.random.uniform(k_ih, (input_size, 4 * hidden_size),
                                  jnp.float32, -stdv, stdv)
        w_hh = jax.random.uniform(k_hh, (hidden_size, 4 * hidden_size),
                                  jnp.float32, -stdv, stdv)
        bias = jax.random.uniform(k_b, (4 * hidden_size,), jnp.float32, -stdv, stdv)
        x = jax.random.normal(k_x, (batch, input_size), jnp.float32)
        h0 = jax.random.normal(k_h, (batch, hidden_size), jnp.float32)
        c0 = jax.random.normal(k_c, (batch, hidden_size), jnp.float32)
        return x, h0, c0, w_ih, w_hh, bias

    key = jax.random.PRNGKey(0)
    k1, k2 = jax.random.split(key)

    # Case 1: module-sized shapes (batch=8, input=16, hidden=32) -> padded path.
    x, h0, c0, w_ih, w_hh, bias = make_inputs(k1, 8, 16, 32)
    h_ref, c_ref = reference(x, h0, c0, w_ih, w_hh, bias)

    # fp32 MXU operands: tight check (exercises the single-buffered weights).
    step32 = make_lstm_cell(w_ih, w_hh, bias, mxu_dtype=jnp.float32)
    h1, c1 = step32(x, h0, c0)
    jax.block_until_ready((h1, c1))
    assert h1.shape == (8, 32) and c1.shape == (8, 32)
    assert jnp.allclose(h1, h_ref, atol=3e-5), "h mismatch (fp32 path)"
    assert jnp.allclose(c1, c_ref, atol=3e-5), "c mismatch (fp32 path)"

    # Default bf16 MXU operands (recommended on v5e/v6e/v7x): loose tolerance.
    h1b, c1b = make_lstm_cell(w_ih, w_hh, bias)(x, h0, c0)
    jax.block_until_ready((h1b, c1b))
    assert jnp.allclose(h1b, h_ref, atol=5e-2, rtol=0), "h mismatch (bf16 path)"
    assert jnp.allclose(c1b, c_ref, atol=5e-2, rtol=0), "c mismatch (bf16 path)"

    # Case 2: lane-aligned shapes + forced hidden-axis tiling (exercises the
    # zero-copy no-padding path, 2 batch tiles and the H-tiled 2-D grid).
    x, h0, c0, w_ih, w_hh, bias = make_inputs(k2, 16, 128, 256)
    h_ref, c_ref = reference(x, h0, c0, w_ih, w_hh, bias)
    step_ht = make_lstm_cell(w_ih, w_hh, bias, mxu_dtype=jnp.float32,
                             hidden_tile=128)
    h1, c1 = step_ht(x, h0, c0)
    jax.block_until_ready((h1, c1))
    assert h1.shape == (16, 256) and c1.shape == (16, 256)
    assert jnp.allclose(h1, h_ref, atol=1e-4), "h mismatch (H-tiled path)"
    assert jnp.allclose(c1, c_ref, atol=1e-4), "c mismatch (H-tiled path)"

    print("KERNEL_OK")
</pallas_src>

<mosaic_0001>
module attributes {stable_mosaic.version = 11 : i64} {
  func.func @_lstm_cell_kernel(%arg0: i32, %arg1: i32, %arg2: memref<8x128xf32, #tpu.memory_space<vmem>>, %arg3: memref<8x128xf32, #tpu.memory_space<vmem>>, %arg4: memref<8x128xf32, #tpu.memory_space<vmem>>, %arg5: memref<128x512xf32, #tpu.memory_space<vmem>>, %arg6: memref<128x512xf32, #tpu.memory_space<vmem>>, %arg7: memref<1x512xf32, #tpu.memory_space<vmem>>, %arg8: memref<8x128xf32, #tpu.memory_space<vmem>>, %arg9: memref<8x128xf32, #tpu.memory_space<vmem>>) attributes {dimension_semantics = [#tpu.dimension_semantics<parallel>, #tpu.dimension_semantics<parallel>], iteration_bounds = array<i64: 1, 1>, scalar_prefetch = 0 : i64, scratch_operands = 0 : i64, tpu.core_type = #tpu.core_type<tc>, window_params = [{transform_indices = @transform_0, window_bounds = array<i64: 8, 128>}, {transform_indices = @transform_1, window_bounds = array<i64: 8, 128>}, {transform_indices = @transform_2, window_bounds = array<i64: 8, 128>}, {pipeline_mode = #tpu.pipeline_mode<synchronous>, transform_indices = @transform_3, window_bounds = array<i64: 128, 512>}, {pipeline_mode = #tpu.pipeline_mode<synchronous>, transform_indices = @transform_4, window_bounds = array<i64: 128, 512>}, {pipeline_mode = #tpu.pipeline_mode<synchronous>, transform_indices = @transform_5, window_bounds = array<i64: 1, 512>}, {transform_indices = @transform_6, window_bounds = array<i64: 8, 128>}, {transform_indices = @transform_7, window_bounds = array<i64: 8, 128>}]} {
    %c0 = arith.constant 0 : index
    %c0_0 = arith.constant 0 : index
    %0 = vector.load %arg2[%c0, %c0_0] : memref<8x128xf32, #tpu.memory_space<vmem>>, vector<8x128xf32>
    %c0_1 = arith.constant 0 : index
    %c0_2 = arith.constant 0 : index
    %1 = vector.load %arg5[%c0_1, %c0_2] : memref<128x512xf32, #tpu.memory_space<vmem>>, vector<128x512xf32>
    %cst = arith.constant dense<0.000000e+00> : vector<8x512xf32>
    %2 = tpu.matmul %0, %1, %cst {dimension_numbers = #tpu.dot_dimension_numbers<[1], [0], [0], [1], [0, 0, 1, 1], [], []>} : vector<8x128xf32>, vector<128x512xf32>, vector<8x512xf32> -> vector<8x512xf32>
    %c0_3 = arith.constant 0 : index
    %c0_4 = arith.constant 0 : index
    %3 = vector.load %arg3[%c0_3, %c0_4] : memref<8x128xf32, #tpu.memory_space<vmem>>, vector<8x128xf32>
    %c0_5 = arith.constant 0 : index
    %c0_6 = arith.constant 0 : index
    %4 = vector.load %arg6[%c0_5, %c0_6] : memref<128x512xf32, #tpu.memory_space<vmem>>, vector<128x512xf32>
    %cst_7 = arith.constant dense<0.000000e+00> : vector<8x512xf32>
    %5 = tpu.matmul %3, %4, %cst_7 {dimension_numbers = #tpu.dot_dimension_numbers<[1], [0], [0], [1], [0, 0, 1, 1], [], []>} : vector<8x128xf32>, vector<128x512xf32>, vector<8x512xf32> -> vector<8x512xf32>
    %6 = arith.addf %2, %5 : vector<8x512xf32>
    %c0_8 = arith.constant 0 : index
    %c0_9 = arith.constant 0 : index
    %7 = vector.load %arg7[%c0_8, %c0_9] : memref<1x512xf32, #tpu.memory_space<vmem>>, vector<1x512xf32>
    %8 = vector.broadcast %7 : vector<1x512xf32> to vector<8x512xf32>
    %9 = arith.addf %6, %8 : vector<8x512xf32>
    %10 = vector.extract_strided_slice %9 {offsets = [0, 0], sizes = [8, 384], strides = [1, 1]} : vector<8x512xf32> to vector<8x384xf32>
    %cst_10 = arith.constant 5.000000e-01 : f32
    %11 = vector.broadcast %cst_10 : f32 to vector<8x384xf32>
    %12 = arith.mulf %11, %10 : vector<8x384xf32>
    %13 = math.tanh %12 : vector<8x384xf32>
    %cst_11 = arith.constant 5.000000e-01 : f32
    %14 = vector.broadcast %cst_11 : f32 to vector<8x384xf32>
    %15 = arith.mulf %14, %13 : vector<8x384xf32>
    %cst_12 = arith.constant 5.000000e-01 : f32
    %16 = vector.broadcast %cst_12 : f32 to vector<8x384xf32>
    %17 = arith.addf %15, %16 : vector<8x384xf32>
    %18 = vector.extract_strided_slice %17 {offsets = [0, 0], sizes = [8, 128], strides = [1, 1]} : vector<8x384xf32> to vector<8x128xf32>
    %19 = vector.extract_strided_slice %17 {offsets = [0, 128], sizes = [8, 128], strides = [1, 1]} : vector<8x384xf32> to vector<8x128xf32>
    %20 = vector.extract_strided_slice %17 {offsets = [0, 256], sizes = [8, 128], strides = [1, 1]} : vector<8x384xf32> to vector<8x128xf32>
    %21 = vector.extract_strided_slice %9 {offsets = [0, 384], sizes = [8, 128], strides = [1, 1]} : vector<8x512xf32> to vector<8x128xf32>
    %22 = math.tanh %21 : vector<8x128xf32>
    %c0_13 = arith.constant 0 : index
    %c0_14 = arith.constant 0 : index
    %23 = vector.load %arg4[%c0_13, %c0_14] : memref<8x128xf32, #tpu.memory_space<vmem>>, vector<8x128xf32>
    %24 = arith.mulf %18, %23 : vector<8x128xf32>
    %25 = arith.mulf %19, %22 : vector<8x128xf32>
    %26 = arith.addf %24, %25 : vector<8x128xf32>
    %27 = math.tanh %26 : vector<8x128xf32>
    %28 = arith.mulf %20, %27 : vector<8x128xf32>
    %c0_15 = arith.constant 0 : index
    %c0_16 = arith.constant 0 : index
    %29 = vector.load %arg8[%c0_15, %c0_16] : memref<8x128xf32, #tpu.memory_space<vmem>>, vector<8x128xf32>
    tpu.vector_store %arg8[%c0_15, %c0_16], %28 {strides = array<i32>} : memref<8x128xf32, #tpu.memory_space<vmem>>, vector<8x128xf32>,
    %c0_17 = arith.constant 0 : index
    %c0_18 = arith.constant 0 : index
    %30 = vector.load %arg9[%c0_17, %c0_18] : memref<8x128xf32, #tpu.memory_space<vmem>>, vector<8x128xf32>
    tpu.vector_store %arg9[%c0_17, %c0_18], %26 {strides = array<i32>} : memref<8x128xf32, #tpu.memory_space<vmem>>, vector<8x128xf32>,
    return
  }
  func.func @transform_0(%arg0: i32, %arg1: i32) -> (i32, i32) {
    %c0_i32 = arith.constant 0 : i32
    %c0_i32_0 = arith.constant 0 : i32
    return %arg1, %c0_i32 : i32, i32
  }
  func.func @transform_1(%arg0: i32, %arg1: i32) -> (i32, i32) {
    %c0_i32 = arith.constant 0 : i32
    %c0_i32_0 = arith.constant 0 : i32
    return %arg1, %c0_i32 : i32, i32
  }
  func.func @transform_2(%arg0: i32, %arg1: i32) -> (i32, i32) {
    %c0_i32 = arith.constant 0 : i32
    return %arg1, %arg0 : i32, i32
  }
  func.func @transform_3(%arg0: i32, %arg1: i32) -> (i32, i32) {
    %c0_i32 = arith.constant 0 : i32
    %c0_i32_0 = arith.constant 0 : i32
    return %c0_i32, %arg0 : i32, i32
  }
  func.func @transform_4(%arg0: i32, %arg1: i32) -> (i32, i32) {
    %c0_i32 = arith.constant 0 : i32
    %c0_i32_0 = arith.constant 0 : i32
    return %c0_i32, %arg0 : i32, i32
  }
  func.func @transform_5(%arg0: i32, %arg1: i32) -> (i32, i32) {
    %c0_i32 = arith.constant 0 : i32
    %c0_i32_0 = arith.constant 0 : i32
    return %c0_i32, %arg0 : i32, i32
  }
  func.func @transform_6(%arg0: i32, %arg1: i32) -> (i32, i32) {
    %c0_i32 = arith.constant 0 : i32
    return %arg1, %arg0 : i32, i32
  }
  func.func @transform_7(%arg0: i32, %arg1: i32) -> (i32, i32) {
    %c0_i32 = arith.constant 0 : i32
    return %arg1, %arg0 : i32, i32
  }
}

</mosaic_0001>

<llo_original>
// kernel: tpu_custom_call.1
$region0: #{tpu_custom_call.1}
  #allocation0 [shape = 'u32[]', space=smem, size = 0x4, offset = 0x4, fixed_abs, tag = 'smem constant byte address 0x4 - core index']
  #allocation1 [shape = 'u32[144,128]{1,0:T(1,128)}', space=vmem, size = 0x12000, scoped, tag = 'internal scratch']
  %s0 = inlined_call_operand.hbm [shape: f32[8,128], index: 0, kind: input, shape index: {}]
  %s1 = inlined_call_operand.hbm [shape: f32[8,128], index: 1, kind: input, shape index: {}]
  %s2 = inlined_call_operand.hbm [shape: f32[8,128], index: 2, kind: input, shape index: {}]
  %s3 = inlined_call_operand.hbm [shape: f32[128,512], index: 3, kind: input, shape index: {}]
  %s4 = inlined_call_operand.hbm [shape: f32[128,512], index: 4, kind: input, shape index: {}]
  %s5 = inlined_call_operand.vmem [shape: f32[1,512], index: 5, kind: input, shape index: {}]
  %s6 = inlined_call_operand.hbm [shape: f32[8,128], index: 6, kind: output, shape index: {0}]
  %s7 = inlined_call_operand.hbm [shape: f32[8,128], index: 7, kind: output, shape index: {1}]
  %8 = xla_tuple %s6, %s7
  %s9 = sld [smem:[#allocation0]]
  $region62: #{tpu_custom_call.1} parent=0
    _
  %s11 = ssub.s32 1, %s9
  %s12 = scalar_select 0, %s11, %s9
  $region1: #{tpu_custom_call.1} parent=0
    #allocation2 [shape = 'u8[4096]{0}', space=vmem, size = 0x1000, scoped, tag = 'input window, operand 0, single buffered']
    #allocation3 [shape = 's32[1]{0}', space=sflag, size = 0x4, scoped, tag = 'scoped memory for tpu_custom_call.1']
    #allocation4 [shape = 's32[1]{0}', space=sflag, size = 0x4, scoped, tag = 'scoped memory for tpu_custom_call.1']
    #allocation5 [shape = 'u8[4096]{0}', space=vmem, size = 0x1000, scoped, tag = 'input window, operand 1, single buffered']
    #allocation6 [shape = 's32[1]{0}', space=sflag, size = 0x4, scoped, tag = 'scoped memory for tpu_custom_call.1']
    #allocation7 [shape = 'u8[4096]{0}', space=vmem, size = 0x1000, scoped, tag = 'input window, operand 2, single buffered']
    #allocation8 [shape = 'u8[262144]{0}', space=vmem, size = 0x40000, scoped, tag = 'input window, operand 3, single buffered']
    #allocation9 [shape = 's32[1]{0}', space=sflag, size = 0x4, scoped, tag = 'scoped memory for tpu_custom_call.1']
    #allocation10 [shape = 'u8[262144]{0}', space=vmem, size = 0x40000, scoped, tag = 'input window, operand 4, single buffered']
    #allocation11 [shape = 'u8[4096]{0}', space=vmem, size = 0x1000, scoped, tag = 'output window, operand 0, single buffered']
    #allocation12 [shape = 'u8[4096]{0}', space=vmem, size = 0x1000, scoped, tag = 'output window, operand 1, single buffered']
    #allocation13 [shape = 's32[1]{0}', space=sflag, size = 0x4, scoped, tag = 'scoped memory for tpu_custom_call.1']
    %13 = vsyncpa [#allocation3], 0
    %14 = vsyncpa [#allocation6], 0
    %15 = vsyncpa [#allocation9], 0
    %16 = vsyncpa [#allocation4], 0
    %17 = vsyncpa [#allocation13], 0
    // Predicated region
    $region2: #{tpu_custom_call.1} parent=1 // pred_check
      _
    $region3: #{tpu_custom_call.1} parent=1 // pred_check_branch
      %19 = sbr.rel (0) target = $region5
    $region4: #{tpu_custom_call.1} parent=1 // pred_region
      %s21 = ssub.s32 128, 128
      %22 = vsyncadd [#allocation3], %s21
      %s24 = sshll.u32 [#allocation2], 4
      %s25 = int_to_ptr.vmem [resolvable:$true] %s24
      %27 = dma.hbm_to_vmem [thread:$0]  %s0, 128, %s25, [#allocation3]
    $region5: #{tpu_custom_call.1} parent=1 // pred_fallthru
      _
    // Predicated region
    $region6: #{tpu_custom_call.1} parent=1 // pred_check
      _
    $region7: #{tpu_custom_call.1} parent=1 // pred_check_branch
      %29 = sbr.rel (0) target = $region9
    $region8: #{tpu_custom_call.1} parent=1 // pred_region
      %s31 = ssub.s32 128, 128
      %32 = vsyncadd [#allocation6], %s31
      %s34 = sshll.u32 [#allocation5], 4
      %s35 = int_to_ptr.vmem [resolvable:$true] %s34
      %37 = dma.hbm_to_vmem [thread:$0]  %s1, 128, %s35, [#allocation6]
    $region9: #{tpu_custom_call.1} parent=1 // pred_fallthru
      _
    // Predicated region
    $region10: #{tpu_custom_call.1} parent=1 // pred_check
      _
    $region11: #{tpu_custom_call.1} parent=1 // pred_check_branch
      %39 = sbr.rel (0) target = $region13
    $region12: #{tpu_custom_call.1} parent=1 // pred_region
      %s41 = ssub.s32 128, 128
      %42 = vsyncadd [#allocation6], %s41
      %s44 = sshll.u32 [#allocation7], 4
      %s45 = int_to_ptr.vmem [resolvable:$true] %s44
      %47 = dma.hbm_to_vmem [thread:$0]  %s2, 128, %s45, [#allocation6]
    $region13: #{tpu_custom_call.1} parent=1 // pred_fallthru
      _
    // Predicated region
    $region14: #{tpu_custom_call.1} parent=1 // pred_check
      _
    $region15: #{tpu_custom_call.1} parent=1 // pred_check_branch
      %49 = sbr.rel (0) target = $region17
    $region16: #{tpu_custom_call.1} parent=1 // pred_region
      %s51 = ssub.s32 8192, 8192
      %52 = vsyncadd [#allocation9], %s51
      %s53 = sshll.u32 [#allocation8], 4
      %s54 = int_to_ptr.vmem [resolvable:$true] %s53
      %59 = dma.hbm_to_vmem [thread:$0]  %s3, 8192, %s54, [#allocation9], 512, 512, 32
    $region17: #{tpu_custom_call.1} parent=1 // pred_fallthru
      _
    // Predicated region
    $region18: #{tpu_custom_call.1} parent=1 // pred_check
      _
    $region19: #{tpu_custom_call.1} parent=1 // pred_check_branch
      %61 = sbr.rel (0) target = $region21
    $region20: #{tpu_custom_call.1} parent=1 // pred_region
      %s63 = ssub.s32 8192, 8192
      %64 = vsyncadd [#allocation9], %s63
      %s65 = sshll.u32 [#allocation10], 4
      %s66 = int_to_ptr.vmem [resolvable:$true] %s65
      %71 = dma.hbm_to_vmem [thread:$0]  %s4, 8192, %s66, [#allocation9], 512, 512, 32
    $region21: #{tpu_custom_call.1} parent=1 // pred_fallthru
      _
    // Predicated region
    $region22: #{tpu_custom_call.1} parent=1 // pred_check
      _
    $region23: #{tpu_custom_call.1} parent=1 // pred_check_branch
      %73 = sbr.rel (0) target = $region25
    $region24: #{tpu_custom_call.1} parent=1 // pred_region
      _
    $region25: #{tpu_custom_call.1} parent=1 // pred_fallthru
      _
    // Predicated region
    $region26: #{tpu_custom_call.1} parent=1 // pred_check
      _
    $region27: #{tpu_custom_call.1} parent=1 // pred_check_branch
      %75 = sbr.rel (0) target = $region29
    $region28: #{tpu_custom_call.1} parent=1 // pred_region
      %76 = dma.done [#allocation3], 128
    $region29: #{tpu_custom_call.1} parent=1 // pred_fallthru
      _
    // Predicated region
    $region30: #{tpu_custom_call.1} parent=1 // pred_check
      _
    $region31: #{tpu_custom_call.1} parent=1 // pred_check_branch
      %78 = sbr.rel (0) target = $region33
    $region32: #{tpu_custom_call.1} parent=1 // pred_region
      %79 = dma.done [#allocation6], 128
    $region33: #{tpu_custom_call.1} parent=1 // pred_fallthru
      _
    // Predicated region
    $region34: #{tpu_custom_call.1} parent=1 // pred_check
      _
    $region35: #{tpu_custom_call.1} parent=1 // pred_check_branch
      %81 = sbr.rel (0) target = $region37
    $region36: #{tpu_custom_call.1} parent=1 // pred_region
      %82 = dma.done [#allocation6], 128
    $region37: #{tpu_custom_call.1} parent=1 // pred_fallthru
      _
    // Predicated region
    $region38: #{tpu_custom_call.1} parent=1 // pred_check
      _
    $region39: #{tpu_custom_call.1} parent=1 // pred_check_branch
      %84 = sbr.rel (0) target = $region41
    $region40: #{tpu_custom_call.1} parent=1 // pred_region
      %85 = dma.done [#allocation9], 8192
    $region41: #{tpu_custom_call.1} parent=1 // pred_fallthru
      _
    // Predicated region
    $region42: #{tpu_custom_call.1} parent=1 // pred_check
      _
    $region43: #{tpu_custom_call.1} parent=1 // pred_check_branch
      %87 = sbr.rel (0) target = $region45
    $region44: #{tpu_custom_call.1} parent=1 // pred_region
      %88 = dma.done [#allocation9], 8192
    $region45: #{tpu_custom_call.1} parent=1 // pred_fallthru
      _
    %v89 = vld [vmem:[#allocation2] sm:$0xff]
    %v90 = vld [vmem:[#allocation8] sm:$0xff]
    %v91 = vld [vmem:[#allocation8 + $0x8] sm:$0xff]
    %v92 = vld [vmem:[#allocation8 + $0x10] sm:$0xff]
    %v93 = vld [vmem:[#allocation8 + $0x18] sm:$0xff]
    %v94 = vld [vmem:[#allocation8 + $0x20] sm:$0xff]
    %v95 = vld [vmem:[#allocation8 + $0x28] sm:$0xff]
    %v96 = vld [vmem:[#allocation8 + $0x30] sm:$0xff]
    %v97 = vld [vmem:[#allocation8 + $0x38] sm:$0xff]
    %v98 = vld [vmem:[#allocation8 + $0x40] sm:$0xff]
    %v99 = vld [vmem:[#allocation8 + $0x48] sm:$0xff]
    %v100 = vld [vmem:[#allocation8 + $0x50] sm:$0xff]
    %v101 = vld [vmem:[#allocation8 + $0x58] sm:$0xff]
    %v102 = vld [vmem:[#allocation8 + $0x60] sm:$0xff]
    %v103 = vld [vmem:[#allocation8 + $0x68] sm:$0xff]
    %v104 = vld [vmem:[#allocation8 + $0x70] sm:$0xff]
    %v105 = vld [vmem:[#allocation8 + $0x78] sm:$0xff]
    %v106 = vld [vmem:[#allocation8 + $0x80] sm:$0xff]
    %v107 = vld [vmem:[#allocation8 + $0x88] sm:$0xff]
    %v108 = vld [vmem:[#allocation8 + $0x90] sm:$0xff]
    %v109 = vld [vmem:[#allocation8 + $0x98] sm:$0xff]
    %v110 = vld [vmem:[#allocation8 + $0xa0] sm:$0xff]
    %v111 = vld [vmem:[#allocation8 + $0xa8] sm:$0xff]
    %v112 = vld [vmem:[#allocation8 + $0xb0] sm:$0xff]
    %v113 = vld [vmem:[#allocation8 + $0xb8] sm:$0xff]
    %v114 = vld [vmem:[#allocation8 + $0xc0] sm:$0xff]
    %v115 = vld [vmem:[#allocation8 + $0xc8] sm:$0xff]
    %v116 = vld [vmem:[#allocation8 + $0xd0] sm:$0xff]
    %v117 = vld [vmem:[#allocation8 + $0xd8] sm:$0xff]
    %v118 = vld [vmem:[#allocation8 + $0xe0] sm:$0xff]
    %v119 = vld [vmem:[#allocation8 + $0xe8] sm:$0xff]
    %v120 = vld [vmem:[#allocation8 + $0xf0] sm:$0xff]
    %v121 = vld [vmem:[#allocation8 + $0xf8] sm:$0xff]
    %v122 = vld [vmem:[#allocation8 + $0x100] sm:$0xff]
    %v123 = vld [vmem:[#allocation8 + $0x108] sm:$0xff]
    %v124 = vld [vmem:[#allocation8 + $0x110] sm:$0xff]
    %v125 = vld [vmem:[#allocation8 + $0x118] sm:$0xff]
    %v126 = vld [vmem:[#allocation8 + $0x120] sm:$0xff]
    %v127 = vld [vmem:[#allocation8 + $0x128] sm:$0xff]
    %v128 = vld [vmem:[#allocation8 + $0x130] sm:$0xff]
    %v129 = vld [vmem:[#allocation8 + $0x138] sm:$0xff]
    %v130 = vld [vmem:[#allocation8 + $0x140] sm:$0xff]
    %v131 = vld [vmem:[#allocation8 + $0x148] sm:$0xff]
    %v132 = vld [vmem:[#allocation8 + $0x150] sm:$0xff]
    %v133 = vld [vmem:[#allocation8 + $0x158] sm:$0xff]
    %v134 = vld [vmem:[#allocation8 + $0x160] sm:$0xff]
    %v135 = vld [vmem:[#allocation8 + $0x168] sm:$0xff]
    %v136 = vld [vmem:[#allocation8 + $0x170] sm:$0xff]
    %v137 = vld [vmem:[#allocation8 + $0x178] sm:$0xff]
    %v138 = vld [vmem:[#allocation8 + $0x180] sm:$0xff]
    %v139 = vld [vmem:[#allocation8 + $0x188] sm:$0xff]
    %v140 = vld [vmem:[#allocation8 + $0x190] sm:$0xff]
    %v141 = vld [vmem:[#allocation8 + $0x198] sm:$0xff]
    %v142 = vld [vmem:[#allocation8 + $0x1a0] sm:$0xff]
    %v143 = vld [vmem:[#allocation8 + $0x1a8] sm:$0xff]
    %v144 = vld [vmem:[#allocation8 + $0x1b0] sm:$0xff]
    %v145 = vld [vmem:[#allocation8 + $0x1b8] sm:$0xff]
    %v146 = vld [vmem:[#allocation8 + $0x1c0] sm:$0xff]
    %v147 = vld [vmem:[#allocation8 + $0x1c8] sm:$0xff]
    %v148 = vld [vmem:[#allocation8 + $0x1d0] sm:$0xff]
    %v149 = vld [vmem:[#allocation8 + $0x1d8] sm:$0xff]
    %v150 = vld [vmem:[#allocation8 + $0x1e0] sm:$0xff]
    %v151 = vld [vmem:[#allocation8 + $0x1e8] sm:$0xff]
    %v152 = vld [vmem:[#allocation8 + $0x1f0] sm:$0xff]
    %v153 = vld [vmem:[#allocation8 + $0x1f8] sm:$0xff]
    %v154 = vld [vmem:[#allocation5] sm:$0xff]
    %v155 = vld [vmem:[#allocation10] sm:$0xff]
    %v156 = vld [vmem:[#allocation10 + $0x8] sm:$0xff]
    %v157 = vld [vmem:[#allocation10 + $0x10] sm:$0xff]
    %v158 = vld [vmem:[#allocation10 + $0x18] sm:$0xff]
    %v159 = vld [vmem:[#allocation10 + $0x20] sm:$0xff]
    %v160 = vld [vmem:[#allocation10 + $0x28] sm:$0xff]
    %v161 = vld [vmem:[#allocation10 + $0x30] sm:$0xff]
    %v162 = vld [vmem:[#allocation10 + $0x38] sm:$0xff]
    %v163 = vld [vmem:[#allocation10 + $0x40] sm:$0xff]
    %v164 = vld [vmem:[#allocation10 + $0x48] sm:$0xff]
    %v165 = vld [vmem:[#allocation10 + $0x50] sm:$0xff]
    %v166 = vld [vmem:[#allocation10 + $0x58] sm:$0xff]
    %v167 = vld [vmem:[#allocation10 + $0x60] sm:$0xff]
    %v168 = vld [vmem:[#allocation10 + $0x68] sm:$0xff]
    %v169 = vld [vmem:[#allocation10 + $0x70] sm:$0xff]
    %v170 = vld [vmem:[#allocation10 + $0x78] sm:$0xff]
    %v171 = vld [vmem:[#allocation10 + $0x80] sm:$0xff]
    %v172 = vld [vmem:[#allocation10 + $0x88] sm:$0xff]
    %v173 = vld [vmem:[#allocation10 + $0x90] sm:$0xff]
    %v174 = vld [vmem:[#allocation10 + $0x98] sm:$0xff]
    %v175 = vld [vmem:[#allocation10 + $0xa0] sm:$0xff]
    %v176 = vld [vmem:[#allocation10 + $0xa8] sm:$0xff]
    %v177 = vld [vmem:[#allocation10 + $0xb0] sm:$0xff]
    %v178 = vld [vmem:[#allocation10 + $0xb8] sm:$0xff]
    %v179 = vld [vmem:[#allocation10 + $0xc0] sm:$0xff]
    %v180 = vld [vmem:[#allocation10 + $0xc8] sm:$0xff]
    %v181 = vld [vmem:[#allocation10 + $0xd0] sm:$0xff]
    %v182 = vld [vmem:[#allocation10 + $0xd8] sm:$0xff]
    %v183 = vld [vmem:[#allocation10 + $0xe0] sm:$0xff]
    %v184 = vld [vmem:[#allocation10 + $0xe8] sm:$0xff]
    %v185 = vld [vmem:[#allocation10 + $0xf0] sm:$0xff]
    %v186 = vld [vmem:[#allocation10 + $0xf8] sm:$0xff]
    %v187 = vld [vmem:[#allocation10 + $0x100] sm:$0xff]
    %v188 = vld [vmem:[#allocation10 + $0x108] sm:$0xff]
    %v189 = vld [vmem:[#allocation10 + $0x110] sm:$0xff]
    %v190 = vld [vmem:[#allocation10 + $0x118] sm:$0xff]
    %v191 = vld [vmem:[#allocation10 + $0x120] sm:$0xff]
    %v192 = vld [vmem:[#allocation10 + $0x128] sm:$0xff]
    %v193 = vld [vmem:[#allocation10 + $0x130] sm:$0xff]
    %v194 = vld [vmem:[#allocation10 + $0x138] sm:$0xff]
    %v195 = vld [vmem:[#allocation10 + $0x140] sm:$0xff]
    %v196 = vld [vmem:[#allocation10 + $0x148] sm:$0xff]
    %v197 = vld [vmem:[#allocation10 + $0x150] sm:$0xff]
    %v198 = vld [vmem:[#allocation10 + $0x158] sm:$0xff]
    %v199 = vld [vmem:[#allocation10 + $0x160] sm:$0xff]
    %v200 = vld [vmem:[#allocation10 + $0x168] sm:$0xff]
    %v201 = vld [vmem:[#allocation10 + $0x170] sm:$0xff]
    %v202 = vld [vmem:[#allocation10 + $0x178] sm:$0xff]
    %v203 = vld [vmem:[#allocation10 + $0x180] sm:$0xff]
    %v204 = vld [vmem:[#allocation10 + $0x188] sm:$0xff]
    %v205 = vld [vmem:[#allocation10 + $0x190] sm:$0xff]
    %v206 = vld [vmem:[#allocation10 + $0x198] sm:$0xff]
    %v207 = vld [vmem:[#allocation10 + $0x1a0] sm:$0xff]
    %v208 = vld [vmem:[#allocation10 + $0x1a8] sm:$0xff]
    %v209 = vld [vmem:[#allocation10 + $0x1b0] sm:$0xff]
    %v210 = vld [vmem:[#allocation10 + $0x1b8] sm:$0xff]
    %v211 = vld [vmem:[#allocation10 + $0x1c0] sm:$0xff]
    %v212 = vld [vmem:[#allocation10 + $0x1c8] sm:$0xff]
    %v213 = vld [vmem:[#allocation10 + $0x1d0] sm:$0xff]
    %v214 = vld [vmem:[#allocation10 + $0x1d8] sm:$0xff]
    %v215 = vld [vmem:[#allocation10 + $0x1e0] sm:$0xff]
    %v216 = vld [vmem:[#allocation10 + $0x1e8] sm:$0xff]
    %v217 = vld [vmem:[#allocation10 + $0x1f0] sm:$0xff]
    %v218 = vld [vmem:[#allocation10 + $0x1f8] sm:$0xff]
    %219 = vmatprep.subr.mxu0 %v156
    %220 = vmatpush1.msra.mxu0 %v155
    %221 = vmatprep.subr.mxu0 %v160
    %222 = vmatpush1.msra.mxu0 %v159
    %223 = vmatprep.subr.mxu0 %v164
    %224 = vmatpush1.msra.mxu0 %v163
    %225 = vmatprep.subr.mxu0 %v168
    %226 = vmatpush1.msra.mxu0 %v167
    %227 = vmatprep.subr.mxu0 %v172
    %228 = vmatpush1.msra.mxu0 %v171
    %229 = vmatprep.subr.mxu0 %v176
    %230 = vmatpush1.msra.mxu0 %v175
    %231 = vmatprep.subr.mxu0 %v180
    %232 = vmatpush1.msra.mxu0 %v179
    %233 = vmatprep.subr.mxu0 %v184
    %234 = vmatpush1.msra.mxu0 %v183
    %235 = vmatprep.subr.mxu0 %v188
    %236 = vmatpush1.msra.mxu0 %v187
    %237 = vmatprep.subr.mxu0 %v192
    %238 = vmatpush1.msra.mxu0 %v191
    %239 = vmatprep.subr.mxu0 %v196
    %240 = vmatpush1.msra.mxu0 %v195
    %241 = vmatprep.subr.mxu0 %v200
    %242 = vmatpush1.msra.mxu0 %v199
    %243 = vmatprep.subr.mxu0 %v204
    %244 = vmatpush1.msra.mxu0 %v203
    %245 = vmatprep.subr.mxu0 %v208
    %246 = vmatpush1.msra.mxu0 %v207
    %247 = vmatprep.subr.mxu0 %v212
    %248 = vmatpush1.msra.mxu0 %v211
    %249 = vmatprep.subr.mxu0 %v216
    %250 = vmatpush1.msra.mxu0 %v215
    %251 = vmatprep.subr.mxu0 0.0
    %252 = vmatpush1.msra.mxu0 0.0
    %253 = vmatprep.subr.mxu0 0.0
    %254 = vmatpush1.msra.mxu0 0.0
    %255 = vmatprep.subr.mxu0 0.0
    %256 = vmatpush1.msra.mxu0 0.0
    %257 = vmatprep.subr.mxu0 0.0
    %258 = vmatpush1.msra.mxu0 0.0
    %259 = vmatprep.subr.mxu0 0.0
    %260 = vmatpush1.msra.mxu0 0.0
    %261 = vmatprep.subr.mxu0 0.0
    %262 = vmatpush1.msra.mxu0 0.0
    %263 = vmatprep.subr.mxu0 0.0
    %264 = vmatpush1.msra.mxu0 0.0
    %265 = vmatprep.subr.mxu0 0.0
    %266 = vmatpush1.msra.mxu0 0.0
    %267 = vmatprep.subr.mxu0 0.0
    %268 = vmatpush1.msra.mxu0 0.0
    %269 = vmatprep.subr.mxu0 0.0
    %270 = vmatpush1.msra.mxu0 0.0
    %271 = vmatprep.subr.mxu0 0.0
    %272 = vmatpush1.msra.mxu0 0.0
    %273 = vmatprep.subr.mxu0 0.0
    %274 = vmatpush1.msra.mxu0 0.0
    %275 = vmatprep.subr.mxu0 0.0
    %276 = vmatpush1.msra.mxu0 0.0
    %277 = vmatprep.subr.mxu0 0.0
    %278 = vmatpush1.msra.mxu0 0.0
    %279 = vmatprep.subr.mxu0 0.0
    %280 = vmatpush1.msra.mxu0 0.0
    %281 = vmatprep.subr.mxu0 0.0
    %282 = vmatpush1.msra.mxu0 0.0
    %283 = vmatprep.mubr.f32.mxu0 0.0
    %284 = vmatmul.mubr.f32.gmra.mrb[0].mxu0 %v154
    %v285 = vpop.f32.mrb[0].mxu0
    %v286 = vadd.f32 0.0, %v285
    %v287 = vpop.f32.mrb[0].mxu0
    %v288 = vadd.f32 0.0, %v287
    %289 = vdwg.mxu0
    %290 = vmatprep.subr.mxu0 %v158
    %291 = vmatpush1.msra.mxu0 %v157
    %292 = vmatprep.subr.mxu0 %v162
    %293 = vmatpush1.msra.mxu0 %v161
    %294 = vmatprep.subr.mxu0 %v166
    %295 = vmatpush1.msra.mxu0 %v165
    %296 = vmatprep.subr.mxu0 %v170
    %297 = vmatpush1.msra.mxu0 %v169
    %298 = vmatprep.subr.mxu0 %v174
    %299 = vmatpush1.msra.mxu0 %v173
    %300 = vmatprep.subr.mxu0 %v178
    %301 = vmatpush1.msra.mxu0 %v177
    %302 = vmatprep.subr.mxu0 %v182
    %303 = vmatpush1.msra.mxu0 %v181
    %304 = vmatprep.subr.mxu0 %v186
    %305 = vmatpush1.msra.mxu0 %v185
    %306 = vmatprep.subr.mxu0 %v190
    %307 = vmatpush1.msra.mxu0 %v189
    %308 = vmatprep.subr.mxu0 %v194
    %309 = vmatpush1.msra.mxu0 %v193
    %310 = vmatprep.subr.mxu0 %v198
    %311 = vmatpush1.msra.mxu0 %v197
    %312 = vmatprep.subr.mxu0 %v202
    %313 = vmatpush1.msra.mxu0 %v201
    %314 = vmatprep.subr.mxu0 %v206
    %315 = vmatpush1.msra.mxu0 %v205
    %316 = vmatprep.subr.mxu0 %v210
    %317 = vmatpush1.msra.mxu0 %v209
    %318 = vmatprep.subr.mxu0 %v214
    %319 = vmatpush1.msra.mxu0 %v213
    %320 = vmatprep.subr.mxu0 %v218
    %321 = vmatpush1.msra.mxu0 %v217
    %322 = vmatprep.subr.mxu0 0.0
    %323 = vmatpush1.msra.mxu0 0.0
    %324 = vmatprep.subr.mxu0 0.0
    %325 = vmatpush1.msra.mxu0 0.0
    %326 = vmatprep.subr.mxu0 0.0
    %327 = vmatpush1.msra.mxu0 0.0
    %328 = vmatprep.subr.mxu0 0.0
    %329 = vmatpush1.msra.mxu0 0.0
    %330 = vmatprep.subr.mxu0 0.0
    %331 = vmatpush1.msra.mxu0 0.0
    %332 = vmatprep.subr.mxu0 0.0
    %333 = vmatpush1.msra.mxu0 0.0
    %334 = vmatprep.subr.mxu0 0.0
    %335 = vmatpush1.msra.mxu0 0.0
    %336 = vmatprep.subr.mxu0 0.0
    %337 = vmatpush1.msra.mxu0 0.0
    %338 = vmatprep.subr.mxu0 0.0
    %339 = vmatpush1.msra.mxu0 0.0
    %340 = vmatprep.subr.mxu0 0.0
    %341 = vmatpush1.msra.mxu0 0.0
    %342 = vmatprep.subr.mxu0 0.0
    %343 = vmatpush1.msra.mxu0 0.0
    %344 = vmatprep.subr.mxu0 0.0
    %345 = vmatpush1.msra.mxu0 0.0
    %346 = vmatprep.subr.mxu0 0.0
    %347 = vmatpush1.msra.mxu0 0.0
    %348 = vmatprep.subr.mxu0 0.0
    %349 = vmatpush1.msra.mxu0 0.0
    %350 = vmatprep.subr.mxu0 0.0
    %351 = vmatpush1.msra.mxu0 0.0
    %352 = vmatprep.subr.mxu0 0.0
    %353 = vmatpush1.msra.mxu0 0.0
    %354 = vmatprep.mubr.f32.mxu0 0.0
    %355 = vmatmul.mubr.f32.gmra.mrb[0].mxu0 %v154
    %v356 = vpop.f32.mrb[0].mxu0
    %v357 = vadd.f32 0.0, %v356
    %v358 = vpop.f32.mrb[0].mxu0
    %v359 = vadd.f32 0.0, %v358
    %360 = vdwg.mxu0
    %361 = vmatprep.subr.mxu0 %v91
    %362 = vmatpush1.msra.mxu0 %v90
    %363 = vmatprep.subr.mxu0 %v95
    %364 = vmatpush1.msra.mxu0 %v94
    %365 = vmatprep.subr.mxu0 %v99
    %366 = vmatpush1.msra.mxu0 %v98
    %367 = vmatprep.subr.mxu0 %v103
    %368 = vmatpush1.msra.mxu0 %v102
    %369 = vmatprep.subr.mxu0 %v107
    %370 = vmatpush1.msra.mxu0 %v106
    %371 = vmatprep.subr.mxu0 %v111
    %372 = vmatpush1.msra.mxu0 %v110
    %373 = vmatprep.subr.mxu0 %v115
    %374 = vmatpush1.msra.mxu0 %v114
    %375 = vmatprep.subr.mxu0 %v119
    %376 = vmatpush1.msra.mxu0 %v118
    %377 = vmatprep.subr.mxu0 %v123
    %378 = vmatpush1.msra.mxu0 %v122
    %379 = vmatprep.subr.mxu0 %v127
    %380 = vmatpush1.msra.mxu0 %v126
    %381 = vmatprep.subr.mxu0 %v131
    %382 = vmatpush1.msra.mxu0 %v130
    %383 = vmatprep.subr.mxu0 %v135
    %384 = vmatpush1.msra.mxu0 %v134
    %385 = vmatprep.subr.mxu0 %v139
    %386 = vmatpush1.msra.mxu0 %v138
    %387 = vmatprep.subr.mxu0 %v143
    %388 = vmatpush1.msra.mxu0 %v142
    %389 = vmatprep.subr.mxu0 %v147
    %390 = vmatpush1.msra.mxu0 %v146
    %391 = vmatprep.subr.mxu0 %v151
    %392 = vmatpush1.msra.mxu0 %v150
    %393 = vmatprep.subr.mxu0 0.0
    %394 = vmatpush1.msra.mxu0 0.0
    %395 = vmatprep.subr.mxu0 0.0
    %396 = vmatpush1.msra.mxu0 0.0
    %397 = vmatprep.subr.mxu0 0.0
    %398 = vmatpush1.msra.mxu0 0.0
    %399 = vmatprep.subr.mxu0 0.0
    %400 = vmatpush1.msra.mxu0 0.0
    %401 = vmatprep.subr.mxu0 0.0
    %402 = vmatpush1.msra.mxu0 0.0
    %403 = vmatprep.subr.mxu0 0.0
    %404 = vmatpush1.msra.mxu0 0.0
    %405 = vmatprep.subr.mxu0 0.0
    %406 = vmatpush1.msra.mxu0 0.0
    %407 = vmatprep.subr.mxu0 0.0
    %408 = vmatpush1.msra.mxu0 0.0
    %409 = vmatprep.subr.mxu0 0.0
    %410 = vmatpush1.msra.mxu0 0.0
    %411 = vmatprep.subr.mxu0 0.0
    %412 = vmatpush1.msra.mxu0 0.0
    %413 = vmatprep.subr.mxu0 0.0
    %414 = vmatpush1.msra.mxu0 0.0
    %415 = vmatprep.subr.mxu0 0.0
    %416 = vmatpush1.msra.mxu0 0.0
    %417 = vmatprep.subr.mxu0 0.0
    %418 = vmatpush1.msra.mxu0 0.0
    %419 = vmatprep.subr.mxu0 0.0
    %420 = vmatpush1.msra.mxu0 0.0
    %421 = vmatprep.subr.mxu0 0.0
    %422 = vmatpush1.msra.mxu0 0.0
    %423 = vmatprep.subr.mxu0 0.0
    %424 = vmatpush1.msra.mxu0 0.0
    %425 = vmatprep.mubr.f32.mxu0 0.0
    %426 = vmatmul.mubr.f32.gmra.mrb[0].mxu0 %v89
    %v427 = vpop.f32.mrb[0].mxu0
    %v428 = vadd.f32 %v286, %v427
    %v429 = vpop.f32.mrb[0].mxu0
    %v430 = vadd.f32 %v288, %v429
    %431 = vdwg.mxu0
    %432 = vmatprep.subr.mxu0 %v93
    %433 = vmatpush1.msra.mxu0 %v92
    %434 = vmatprep.subr.mxu0 %v97
    %435 = vmatpush1.msra.mxu0 %v96
    %436 = vmatprep.subr.mxu0 %v101
    %437 = vmatpush1.msra.mxu0 %v100
    %438 = vmatprep.subr.mxu0 %v105
    %439 = vmatpush1.msra.mxu0 %v104
    %440 = vmatprep.subr.mxu0 %v109
    %441 = vmatpush1.msra.mxu0 %v108
    %442 = vmatprep.subr.mxu0 %v113
    %443 = vmatpush1.msra.mxu0 %v112
    %444 = vmatprep.subr.mxu0 %v117
    %445 = vmatpush1.msra.mxu0 %v116
    %446 = vmatprep.subr.mxu0 %v121
    %447 = vmatpush1.msra.mxu0 %v120
    %448 = vmatprep.subr.mxu0 %v125
    %449 = vmatpush1.msra.mxu0 %v124
    %450 = vmatprep.subr.mxu0 %v129
    %451 = vmatpush1.msra.mxu0 %v128
    %452 = vmatprep.subr.mxu0 %v133
    %453 = vmatpush1.msra.mxu0 %v132
    %454 = vmatprep.subr.mxu0 %v137
    %455 = vmatpush1.msra.mxu0 %v136
    %456 = vmatprep.subr.mxu0 %v141
    %457 = vmatpush1.msra.mxu0 %v140
    %458 = vmatprep.subr.mxu0 %v145
    %459 = vmatpush1.msra.mxu0 %v144
    %460 = vmatprep.subr.mxu0 %v149
    %461 = vmatpush1.msra.mxu0 %v148
    %462 = vmatprep.subr.mxu0 %v153
    %463 = vmatpush1.msra.mxu0 %v152
    %464 = vmatprep.subr.mxu0 0.0
    %465 = vmatpush1.msra.mxu0 0.0
    %466 = vmatprep.subr.mxu0 0.0
    %467 = vmatpush1.msra.mxu0 0.0
    %468 = vmatprep.subr.mxu0 0.0
    %469 = vmatpush1.msra.mxu0 0.0
    %470 = vmatprep.subr.mxu0 0.0
    %471 = vmatpush1.msra.mxu0 0.0
    %472 = vmatprep.subr.mxu0 0.0
    %473 = vmatpush1.msra.mxu0 0.0
    %474 = vmatprep.subr.mxu0 0.0
    %475 = vmatpush1.msra.mxu0 0.0
    %476 = vmatprep.subr.mxu0 0.0
    %477 = vmatpush1.msra.mxu0 0.0
    %478 = vmatprep.subr.mxu0 0.0
    %479 = vmatpush1.msra.mxu0 0.0
    %480 = vmatprep.subr.mxu0 0.0
    %481 = vmatpush1.msra.mxu0 0.0
    %482 = vmatprep.subr.mxu0 0.0
    %483 = vmatpush1.msra.mxu0 0.0
    %484 = vmatprep.subr.mxu0 0.0
    %485 = vmatpush1.msra.mxu0 0.0
    %486 = vmatprep.subr.mxu0 0.0
    %487 = vmatpush1.msra.mxu0 0.0
    %488 = vmatprep.subr.mxu0 0.0
    %489 = vmatpush1.msra.mxu0 0.0
    %490 = vmatprep.subr.mxu0 0.0
    %491 = vmatpush1.msra.mxu0 0.0
    %492 = vmatprep.subr.mxu0 0.0
    %493 = vmatpush1.msra.mxu0 0.0
    %494 = vmatprep.subr.mxu0 0.0
    %495 = vmatpush1.msra.mxu0 0.0
    %496 = vmatprep.mubr.f32.mxu0 0.0
    %497 = vmatmul.mubr.f32.gmra.mrb[0].mxu0 %v89
    %v498 = vpop.f32.mrb[0].mxu0
    %v499 = vadd.f32 %v357, %v498
    %v500 = vpop.f32.mrb[0].mxu0
    %v501 = vadd.f32 %v359, %v500
    %502 = vdwg.mxu0
    %v503 = vld [vmem:[%s5] sm:$0xf]
    %v505 = vlaneseq
    %v506 = vshrl.u32 %v505, 7
    %v507 = vsub.s32 0, %v506
    %v508 = vrot.slane %v503, %v507
    %v509 = vlaneseq
    %v510 = vshrl.u32 %v509, 7
    %v511 = vsub.s32 1, %v510
    %v512 = vrot.slane %v503, %v511
    %v513 = vlaneseq
    %v514 = vshrl.u32 %v513, 7
    %v515 = vsub.s32 2, %v514
    %v516 = vrot.slane %v503, %v515
    %v517 = vlaneseq
    %v518 = vshrl.u32 %v517, 7
    %v519 = vsub.s32 3, %v518
    %v520 = vrot.slane %v503, %v519
    %v525 = vadd.f32 %v428, %v508
    %v526 = vadd.f32 %v430, %v512
    %v527 = vadd.f32 %v499, %v516
    %v528 = vadd.f32 %v501, %v520
    %v529 = vmul.f32 %v525, 0.5
    %v530 = vmul.f32 %v526, 0.5
    %v531 = vmul.f32 %v527, 0.5
    %v532 = vtanh.pop %v529
    %v533 = vtanh.pop %v530
    %v534 = vtanh.pop %v531
    %v535 = vmul.f32 %v532, 0.5
    %v536 = vmul.f32 %v533, 0.5
    %v537 = vmul.f32 %v534, 0.5
    %v538 = vadd.f32 %v535, 0.5
    %v539 = vadd.f32 %v536, 0.5
    %v540 = vadd.f32 %v537, 0.5
    %v541 = vtanh.pop %v528
    %v542 = vld [vmem:[#allocation7] sm:$0xff]
    %v543 = vmul.f32 %v538, %v542
    %v544 = vmul.f32 %v539, %v541
    %v545 = vadd.f32 %v543, %v544
    %v546 = vtanh.pop %v545
    %v547 = vmul.f32 %v540, %v546
    %548 = vst [vmem:[#allocation11] sm:$0xff] %v547
    %549 = vst [vmem:[#allocation12] sm:$0xff] %v545
    // Predicated region
    $region46: #{tpu_custom_call.1} parent=1 // pred_check
      _
    $region47: #{tpu_custom_call.1} parent=1 // pred_check_branch
      %551 = sbr.rel (0) target = $region49
    $region48: #{tpu_custom_call.1} parent=1 // pred_region
      %s553 = ssub.s32 128, 128
      %554 = vsyncadd [#allocation4], %s553
      %s556 = sshll.u32 [#allocation11], 4
      %s557 = int_to_ptr.vmem [resolvable:$true] %s556
      %559 = dma.vmem_to_hbm [thread:$0]  %s557, 128, %s6, [#allocation4]
    $region49: #{tpu_custom_call.1} parent=1 // pred_fallthru
      _
    // Predicated region
    $region50: #{tpu_custom_call.1} parent=1 // pred_check
      _
    $region51: #{tpu_custom_call.1} parent=1 // pred_check_branch
      %561 = sbr.rel (0) target = $region53
    $region52: #{tpu_custom_call.1} parent=1 // pred_region
      %s563 = ssub.s32 128, 128
      %564 = vsyncadd [#allocation13], %s563
      %s566 = sshll.u32 [#allocation12], 4
      %s567 = int_to_ptr.vmem [resolvable:$true] %s566
      %569 = dma.vmem_to_hbm [thread:$0]  %s567, 128, %s7, [#allocation13]
    $region53: #{tpu_custom_call.1} parent=1 // pred_fallthru
      _
    // Predicated region
    $region54: #{tpu_custom_call.1} parent=1 // pred_check
      _
    $region55: #{tpu_custom_call.1} parent=1 // pred_check_branch
      %571 = sbr.rel (0) target = $region57
    $region56: #{tpu_custom_call.1} parent=1 // pred_region
      %572 = dma.done [#allocation4], 128
    $region57: #{tpu_custom_call.1} parent=1 // pred_fallthru
      _
    // Predicated region
    $region58: #{tpu_custom_call.1} parent=1 // pred_check
      _
    $region59: #{tpu_custom_call.1} parent=1 // pred_check_branch
      %574 = sbr.rel (0) target = $region61
    $region60: #{tpu_custom_call.1} parent=1 // pred_region
      %575 = dma.done [#allocation13], 128
    $region61: #{tpu_custom_call.1} parent=1 // pred_fallthru
      _
    %576 = vsyncpa [#allocation3], 1
    %577 = vsyncpa [#allocation6], 1
    %578 = vsyncpa [#allocation9], 1
    %579 = vsyncpa [#allocation4], 1
    %580 = vsyncpa [#allocation13], 1

</llo_original>
